<compile_context>
chip_gen: v6e
topology: v6e:2x2x1
jax: 0.10.0
libtpu: 0.0.40
codegen_flags: <defaults>
</compile_context>

<pallas_src>
import functools

import jax
import jax.numpy as jnp
from jax.experimental import pallas as pl
from jax.experimental.pallas import tpu as pltpu

KSIZE = 7
PAD = 3
LANE = 128


def _round_up(x, m):
    return ((x + m - 1) // m) * m


def _convnext_kernel(x_hbm, dww_ref, dwb_ref, g_ref, bta_ref,
                     w1_ref, b1_ref, w2_ref, b2_ref, o_ref,
                     xbuf, dma_sem, *, tile_t, c_real, c_pad):
    # x_hbm   : (B, T_pad + 6, C_pad) f32  -- full padded input, left in HBM (ANY)
    # dww_ref : (7, C_pad)  depthwise conv weights (tap, channel)
    # dwb_ref : (1, C_pad)  depthwise conv bias
    # g_ref   : (1, C_pad)  LayerNorm gamma
    # bta_ref : (1, C_pad)  LayerNorm beta
    # w1_ref  : (C_pad, I_pad) bf16   pwconv1 weight (transposed for x @ W)
    # b1_ref  : (1, I_pad)  f32
    # w2_ref  : (I_pad, C_pad) bf16   pwconv2 weight
    # b2_ref  : (1, C_pad)  f32
    # o_ref   : (1, tile_t, C_pad) f32
    # xbuf    : VMEM scratch (2, tile_t + 6, C_pad) -- double-buffered halo window
    # dma_sem : DMA semaphores (2,)
    b = pl.program_id(0)
    t = pl.program_id(1)
    n_t = pl.num_programs(1)
    tT = tile_t
    win = tT + 2 * PAD
    slot = t & 1

    def halo_copy(tile_idx, buf_slot):
        start = pl.multiple_of(tile_idx * tT, 8)
        return pltpu.make_async_copy(
            x_hbm.at[b, pl.ds(start, win), :],
            xbuf.at[buf_slot],
            dma_sem.at[buf_slot])

    # First tile of each batch row: issue its own halo DMA (not prefetched).
    @pl.when(t == 0)
    def _():
        halo_copy(t, slot).start()

    # Prefetch the next tile's halo window into the other buffer (overlaps with
    # this tile's compute).  Never crosses the batch row -> safe under megacore
    # sharding of the batch ("parallel") axis.
    @pl.when(t + 1 < n_t)
    def _():
        halo_copy(t + 1, 1 - slot).start()

    halo_copy(t, slot).wait()
    xp = xbuf[slot]                                   # (tT + 6, C_pad) f32

    # ---- depthwise conv1d (kernel 7, 'same' zero padding), per-channel ----
    dw = dww_ref[...]                                 # load taps once
    acc = xp[0:tT, :] * dw[0:1, :]
    for k in range(1, KSIZE):                         # static unroll: 7 shifted FMAs
        acc = acc + xp[k:k + tT, :] * dw[k:k + 1, :]
    conv = acc + dwb_ref[...]                         # (tT, C_pad); padded lanes == 0

    # ---- LayerNorm over the REAL channels (eps = 1e-6, biased variance) ----
    inv_c = 1.0 / c_real
    mean = jnp.sum(conv, axis=-1, keepdims=True) * inv_c   # pad lanes are zero
    cen = conv - mean
    if c_pad != c_real:
        lane = jax.lax.broadcasted_iota(jnp.int32, (1, c_pad), 1)
        cen_m = jnp.where(lane < c_real, cen, 0.0)    # exclude padded channels
    else:
        cen_m = cen
    var = jnp.sum(cen_m * cen_m, axis=-1, keepdims=True) * inv_c
    h = cen * jax.lax.rsqrt(var + 1e-6) * g_ref[...] + bta_ref[...]

    # ---- pwconv1 (bf16 MXU) -> exact GELU -> pwconv2 (bf16 MXU) ----
    h1 = jnp.dot(h.astype(jnp.bfloat16), w1_ref[...],
                 preferred_element_type=jnp.float32) + b1_ref[...]
    h1 = 0.5 * h1 * (1.0 + jax.lax.erf(h1 * 0.7071067811865476))
    h2 = jnp.dot(h1.astype(jnp.bfloat16), w2_ref[...],
                 preferred_element_type=jnp.float32) + b2_ref[...]

    # ---- residual add (residual = center of the halo window) ----
    o_ref[0] = xp[PAD:PAD + tT, :] + h2


def basic_convnext_block(x_ncl, params, *, tile_t=256):
    """x_ncl: (B, dim, T) float32, matching the PyTorch module's input layout."""
    B, C, T = x_ncl.shape
    I = params["w1"].shape[1]

    C_pad = _round_up(C, LANE)                        # lane-dense channel dim
    I_pad = _round_up(I, LANE)                        # lane-dense intermediate dim
    tT = _round_up(min(tile_t, _round_up(T, 8)), 8)   # time tile (multiple of 8)
    T_pad = _round_up(T, tT)
    nT = T_pad // tT

    # channels-last; one pad op adds conv halo (+3/+3), tile tail and channel pad.
    x_btc = jnp.transpose(x_ncl, (0, 2, 1)).astype(jnp.float32)   # (B, T, C)
    x_halo = jnp.pad(x_btc, ((0, 0), (PAD, T_pad - T + PAD), (0, C_pad - C)))
    # -> (B, T_pad + 6, C_pad)

    def padto(a, axis, target):
        widths = [(0, 0)] * a.ndim
        widths[axis] = (0, target - a.shape[axis])
        return jnp.pad(a, widths)

    dw_w = padto(params["dw_w"], 1, C_pad)                        # (7, C_pad) f32
    dw_b = padto(params["dw_b"], 1, C_pad)                        # (1, C_pad)
    ln_g = padto(params["ln_g"], 1, C_pad)
    ln_b = padto(params["ln_b"], 1, C_pad)
    w1 = padto(padto(params["w1"], 0, C_pad), 1, I_pad).astype(jnp.bfloat16)
    b1 = padto(params["b1"], 1, I_pad)
    w2 = padto(padto(params["w2"], 0, I_pad), 1, C_pad).astype(jnp.bfloat16)
    b2 = padto(params["b2"], 1, C_pad)

    kernel = functools.partial(_convnext_kernel, tile_t=tT, c_real=C, c_pad=C_pad)

    out = pl.pallas_call(
        kernel,
        out_shape=jax.ShapeDtypeStruct((B, T_pad, C_pad), jnp.float32),
        grid_spec=pltpu.PrefetchScalarGridSpec(
            num_scalar_prefetch=0,
            grid=(B, nT),
            in_specs=[
                pl.BlockSpec(memory_space=pl.ANY),                    # x_halo (HBM)
                pl.BlockSpec((KSIZE, C_pad), lambda b, t: (0, 0)),    # dw weight
                pl.BlockSpec((1, C_pad), lambda b, t: (0, 0)),        # dw bias
                pl.BlockSpec((1, C_pad), lambda b, t: (0, 0)),        # ln gamma
                pl.BlockSpec((1, C_pad), lambda b, t: (0, 0)),        # ln beta
                pl.BlockSpec((C_pad, I_pad), lambda b, t: (0, 0)),    # w1 (bf16)
                pl.BlockSpec((1, I_pad), lambda b, t: (0, 0)),        # b1
                pl.BlockSpec((I_pad, C_pad), lambda b, t: (0, 0)),    # w2 (bf16)
                pl.BlockSpec((1, C_pad), lambda b, t: (0, 0)),        # b2
            ],
            out_specs=pl.BlockSpec((1, tT, C_pad), lambda b, t: (b, t, 0)),
            scratch_shapes=[
                pltpu.VMEM((2, tT + 2 * PAD, C_pad), jnp.float32),    # halo buffers
                pltpu.SemaphoreType.DMA((2,)),
            ],
        ),
        compiler_params=pltpu.CompilerParams(
            dimension_semantics=("parallel", "arbitrary"),
            vmem_limit_bytes=32 * 1024 * 1024,        # sweep per generation / shape
        ),
    )(x_halo, dw_w, dw_b, ln_g, ln_b, w1, b1, w2, b2)

    out = out[:, :T, :C]                              # drop time/channel padding
    return jnp.transpose(out, (0, 2, 1))              # back to (B, C, T)


def _reference(x_ncl, params):
    """Pure-JAX f32 reference of the PyTorch forward, for verification."""
    B, C, T = x_ncl.shape
    x = jnp.transpose(x_ncl, (0, 2, 1))                           # (B, T, C)
    xp = jnp.pad(x, ((0, 0), (PAD, PAD), (0, 0)))
    conv = jnp.zeros_like(x)
    for k in range(KSIZE):
        conv = conv + xp[:, k:k + T, :] * params["dw_w"][k][None, None, :]
    conv = conv + params["dw_b"]
    mean = conv.mean(-1, keepdims=True)
    var = ((conv - mean) ** 2).mean(-1, keepdims=True)
    h = (conv - mean) / jnp.sqrt(var + 1e-6) * params["ln_g"] + params["ln_b"]
    h1 = h @ params["w1"] + params["b1"]
    h1 = 0.5 * h1 * (1.0 + jax.lax.erf(h1 * 0.7071067811865476))
    h2 = h1 @ params["w2"] + params["b2"]
    out = x + h2
    return jnp.transpose(out, (0, 2, 1))


def init_params(key, dim, intermediate_dim):
    ks = jax.random.split(key, 9)
    s = 0.1
    return {
        # PyTorch Conv1d weight is (dim, 1, 7); stored here as (7, dim)
        "dw_w": s * jax.random.normal(ks[0], (KSIZE, dim), jnp.float32),
        "dw_b": s * jax.random.normal(ks[1], (1, dim), jnp.float32),
        "ln_g": 1.0 + s * jax.random.normal(ks[2], (1, dim), jnp.float32),
        "ln_b": s * jax.random.normal(ks[3], (1, dim), jnp.float32),
        # PyTorch Linear weight is (out, in); stored transposed (in, out)
        "w1": s * jax.random.normal(ks[4], (dim, intermediate_dim), jnp.float32),
        "b1": s * jax.random.normal(ks[5], (1, intermediate_dim), jnp.float32),
        "w2": s * jax.random.normal(ks[6], (intermediate_dim, dim), jnp.float32),
        "b2": s * jax.random.normal(ks[7], (1, dim), jnp.float32),
    }


if __name__ == "__main__":
    # Small shapes; tile_t=16 forces several time tiles (exercises the halo DMA,
    # double-buffering and the tail-tile / channel padding paths).
    B, DIM, INTER, T = 2, 8, 32, 40

    key = jax.random.PRNGKey(0)
    k_x, k_p = jax.random.split(key)
    x = jax.random.normal(k_x, (B, DIM, T), jnp.float32)          # PyTorch NCL layout
    params = init_params(k_p, DIM, INTER)

    out = basic_convnext_block(x, params, tile_t=16)
    out = jax.block_until_ready(out)

    ref = _reference(x, params)
    assert out.shape == (B, DIM, T)
    # bf16 MXU matmuls -> relaxed tolerance vs the exact-f32 reference.
    assert jnp.allclose(out, ref, atol=3e-2, rtol=3e-2), "mismatch vs reference"

    print("KERNEL_OK")
</pallas_src>

<mosaic_0001>
module attributes {stable_mosaic.version = 11 : i64} {
  func.func @_convnext_kernel(%arg0: i32, %arg1: i32, %arg2: memref<2x54x128xf32, #tpu.memory_space<any>>, %arg3: memref<7x128xf32, #tpu.memory_space<vmem>>, %arg4: memref<1x128xf32, #tpu.memory_space<vmem>>, %arg5: memref<1x128xf32, #tpu.memory_space<vmem>>, %arg6: memref<1x128xf32, #tpu.memory_space<vmem>>, %arg7: memref<128x128xbf16, #tpu.memory_space<vmem>>, %arg8: memref<1x128xf32, #tpu.memory_space<vmem>>, %arg9: memref<128x128xbf16, #tpu.memory_space<vmem>>, %arg10: memref<1x128xf32, #tpu.memory_space<vmem>>, %arg11: memref<1x16x128xf32, #tpu.memory_space<vmem>>, %arg12: memref<2x22x128xf32, #tpu.memory_space<vmem>>, %arg13: memref<2x!tpu.dma_semaphore, #tpu.memory_space<semaphore_mem>>) attributes {dimension_semantics = [#tpu.dimension_semantics<parallel>, #tpu.dimension_semantics<arbitrary>], iteration_bounds = array<i64: 2, 3>, scalar_prefetch = 0 : i64, scratch_operands = 2 : i64, tpu.core_type = #tpu.core_type<tc>, window_params = [{}, {pipeline_mode = #tpu.pipeline_mode<synchronous>, transform_indices = @transform_1, window_bounds = array<i64: 7, 128>}, {pipeline_mode = #tpu.pipeline_mode<synchronous>, transform_indices = @transform_2, window_bounds = array<i64: 1, 128>}, {pipeline_mode = #tpu.pipeline_mode<synchronous>, transform_indices = @transform_3, window_bounds = array<i64: 1, 128>}, {pipeline_mode = #tpu.pipeline_mode<synchronous>, transform_indices = @transform_4, window_bounds = array<i64: 1, 128>}, {pipeline_mode = #tpu.pipeline_mode<synchronous>, transform_indices = @transform_5, window_bounds = array<i64: 128, 128>}, {pipeline_mode = #tpu.pipeline_mode<synchronous>, transform_indices = @transform_6, window_bounds = array<i64: 1, 128>}, {pipeline_mode = #tpu.pipeline_mode<synchronous>, transform_indices = @transform_7, window_bounds = array<i64: 128, 128>}, {pipeline_mode = #tpu.pipeline_mode<synchronous>, transform_indices = @transform_8, window_bounds = array<i64: 1, 128>}, {transform_indices = @transform_9, window_bounds = array<i64: 1, 16, 128>}]} {
    %c1_i32 = arith.constant 1 : i32
    %0 = arith.andi %arg1, %c1_i32 : i32
    %c0_i32 = arith.constant 0 : i32
    %1 = arith.cmpi eq, %arg1, %c0_i32 : i32
    %2 = arith.extui %1 : i1 to i32
    %c0_i32_0 = arith.constant 0 : i32
    %3 = arith.cmpi ne, %2, %c0_i32_0 : i32
    scf.if %3 {
      %c16_i32_36 = arith.constant 16 : i32
      %111 = arith.muli %arg1, %c16_i32_36 : i32
      %112 = tpu.assume_multiple %111, 8 : i32
      %c0_i32_37 = arith.constant 0 : i32
      %113 = tpu.memref_slice %arg2[%arg0, %112, %c0_i32_37] : memref<2x54x128xf32, #tpu.memory_space<any>> -> memref<1x22x128xf32, #tpu.memory_space<any>>
      %114 = tpu.memref_squeeze %113 : memref<1x22x128xf32, #tpu.memory_space<any>> -> memref<22x128xf32, #tpu.memory_space<any>>
      %c0_i32_38 = arith.constant 0 : i32
      %c0_i32_39 = arith.constant 0 : i32
      %115 = tpu.memref_slice %arg12[%0, %c0_i32_38, %c0_i32_39] : memref<2x22x128xf32, #tpu.memory_space<vmem>> -> memref<1x22x128xf32, #tpu.memory_space<vmem>>
      %116 = tpu.memref_squeeze %115 : memref<1x22x128xf32, #tpu.memory_space<vmem>> -> memref<22x128xf32, #tpu.memory_space<vmem>>
      %117 = tpu.memref_slice %arg13[%0] : memref<2x!tpu.dma_semaphore, #tpu.memory_space<semaphore_mem>> -> memref<1x!tpu.dma_semaphore, #tpu.memory_space<semaphore_mem>>
      %118 = tpu.memref_squeeze %117 : memref<1x!tpu.dma_semaphore, #tpu.memory_space<semaphore_mem>> -> memref<!tpu.dma_semaphore, #tpu.memory_space<semaphore_mem>>
      tpu.enqueue_dma source(%114 : memref<22x128xf32, #tpu.memory_space<any>>) target(%116 : memref<22x128xf32, #tpu.memory_space<vmem>>) target_semaphore(%118 : memref<!tpu.dma_semaphore, #tpu.memory_space<semaphore_mem>>)
    } else {
    }
    %c1_i32_1 = arith.constant 1 : i32
    %4 = arith.addi %arg1, %c1_i32_1 : i32
    %c3_i32 = arith.constant 3 : i32
    %5 = arith.cmpi slt, %4, %c3_i32 : i32
    %6 = arith.extui %5 : i1 to i32
    %c0_i32_2 = arith.constant 0 : i32
    %7 = arith.cmpi ne, %6, %c0_i32_2 : i32
    scf.if %7 {
      %c1_i32_36 = arith.constant 1 : i32
      %111 = arith.addi %arg1, %c1_i32_36 : i32
      %c1_i32_37 = arith.constant 1 : i32
      %112 = arith.subi %c1_i32_37, %0 : i32
      %c16_i32_38 = arith.constant 16 : i32
      %113 = arith.muli %111, %c16_i32_38 : i32
      %114 = tpu.assume_multiple %113, 8 : i32
      %c0_i32_39 = arith.constant 0 : i32
      %115 = tpu.memref_slice %arg2[%arg0, %114, %c0_i32_39] : memref<2x54x128xf32, #tpu.memory_space<any>> -> memref<1x22x128xf32, #tpu.memory_space<any>>
      %116 = tpu.memref_squeeze %115 : memref<1x22x128xf32, #tpu.memory_space<any>> -> memref<22x128xf32, #tpu.memory_space<any>>
      %c0_i32_40 = arith.constant 0 : i32
      %c0_i32_41 = arith.constant 0 : i32
      %117 = tpu.memref_slice %arg12[%112, %c0_i32_40, %c0_i32_41] : memref<2x22x128xf32, #tpu.memory_space<vmem>> -> memref<1x22x128xf32, #tpu.memory_space<vmem>>
      %118 = tpu.memref_squeeze %117 : memref<1x22x128xf32, #tpu.memory_space<vmem>> -> memref<22x128xf32, #tpu.memory_space<vmem>>
      %119 = tpu.memref_slice %arg13[%112] : memref<2x!tpu.dma_semaphore, #tpu.memory_space<semaphore_mem>> -> memref<1x!tpu.dma_semaphore, #tpu.memory_space<semaphore_mem>>
      %120 = tpu.memref_squeeze %119 : memref<1x!tpu.dma_semaphore, #tpu.memory_space<semaphore_mem>> -> memref<!tpu.dma_semaphore, #tpu.memory_space<semaphore_mem>>
      tpu.enqueue_dma source(%116 : memref<22x128xf32, #tpu.memory_space<any>>) target(%118 : memref<22x128xf32, #tpu.memory_space<vmem>>) target_semaphore(%120 : memref<!tpu.dma_semaphore, #tpu.memory_space<semaphore_mem>>)
    } else {
    }
    %c16_i32 = arith.constant 16 : i32
    %8 = arith.muli %arg1, %c16_i32 : i32
    %9 = tpu.assume_multiple %8, 8 : i32
    %c0_i32_3 = arith.constant 0 : i32
    %10 = tpu.memref_slice %arg2[%arg0, %9, %c0_i32_3] : memref<2x54x128xf32, #tpu.memory_space<any>> -> memref<1x22x128xf32, #tpu.memory_space<any>>
    %11 = tpu.memref_squeeze %10 : memref<1x22x128xf32, #tpu.memory_space<any>> -> memref<22x128xf32, #tpu.memory_space<any>>
    %c0_i32_4 = arith.constant 0 : i32
    %c0_i32_5 = arith.constant 0 : i32
    %12 = tpu.memref_slice %arg12[%0, %c0_i32_4, %c0_i32_5] : memref<2x22x128xf32, #tpu.memory_space<vmem>> -> memref<1x22x128xf32, #tpu.memory_space<vmem>>
    %13 = tpu.memref_squeeze %12 : memref<1x22x128xf32, #tpu.memory_space<vmem>> -> memref<22x128xf32, #tpu.memory_space<vmem>>
    %14 = tpu.memref_slice %arg13[%0] : memref<2x!tpu.dma_semaphore, #tpu.memory_space<semaphore_mem>> -> memref<1x!tpu.dma_semaphore, #tpu.memory_space<semaphore_mem>>
    %15 = tpu.memref_squeeze %14 : memref<1x!tpu.dma_semaphore, #tpu.memory_space<semaphore_mem>> -> memref<!tpu.dma_semaphore, #tpu.memory_space<semaphore_mem>>
    tpu.wait_dma2 semaphore(%15 : memref<!tpu.dma_semaphore, #tpu.memory_space<semaphore_mem>>) src(%11 : memref<22x128xf32, #tpu.memory_space<any>>) dst(%13 : memref<22x128xf32, #tpu.memory_space<vmem>>)
    %16 = arith.index_cast %0 : i32 to index
    %c0 = arith.constant 0 : index
    %c0_6 = arith.constant 0 : index
    %17 = vector.load %arg12[%16, %c0, %c0_6] : memref<2x22x128xf32, #tpu.memory_space<vmem>>, vector<1x22x128xf32>
    %18 = vector.shape_cast %17 : vector<1x22x128xf32> to vector<22x128xf32>
    %c0_7 = arith.constant 0 : index
    %c0_8 = arith.constant 0 : index
    %19 = vector.load %arg3[%c0_7, %c0_8] : memref<7x128xf32, #tpu.memory_space<vmem>>, vector<7x128xf32>
    %20 = vector.extract_strided_slice %18 {offsets = [0, 0], sizes = [16, 128], strides = [1, 1]} : vector<22x128xf32> to vector<16x128xf32>
    %21 = vector.extract_strided_slice %19 {offsets = [0, 0], sizes = [1, 128], strides = [1, 1]} : vector<7x128xf32> to vector<1x128xf32>
    %22 = vector.broadcast %21 : vector<1x128xf32> to vector<16x128xf32>
    %23 = arith.mulf %20, %22 : vector<16x128xf32>
    %24 = vector.extract_strided_slice %18 {offsets = [1, 0], sizes = [16, 128], strides = [1, 1]} : vector<22x128xf32> to vector<16x128xf32>
    %25 = vector.extract_strided_slice %19 {offsets = [1, 0], sizes = [1, 128], strides = [1, 1]} : vector<7x128xf32> to vector<1x128xf32>
    %26 = vector.broadcast %25 : vector<1x128xf32> to vector<16x128xf32>
    %27 = arith.mulf %24, %26 : vector<16x128xf32>
    %28 = arith.addf %23, %27 : vector<16x128xf32>
    %29 = vector.extract_strided_slice %18 {offsets = [2, 0], sizes = [16, 128], strides = [1, 1]} : vector<22x128xf32> to vector<16x128xf32>
    %30 = vector.extract_strided_slice %19 {offsets = [2, 0], sizes = [1, 128], strides = [1, 1]} : vector<7x128xf32> to vector<1x128xf32>
    %31 = vector.broadcast %30 : vector<1x128xf32> to vector<16x128xf32>
    %32 = arith.mulf %29, %31 : vector<16x128xf32>
    %33 = arith.addf %28, %32 : vector<16x128xf32>
    %34 = vector.extract_strided_slice %18 {offsets = [3, 0], sizes = [16, 128], strides = [1, 1]} : vector<22x128xf32> to vector<16x128xf32>
    %35 = vector.extract_strided_slice %19 {offsets = [3, 0], sizes = [1, 128], strides = [1, 1]} : vector<7x128xf32> to vector<1x128xf32>
    %36 = vector.broadcast %35 : vector<1x128xf32> to vector<16x128xf32>
    %37 = arith.mulf %34, %36 : vector<16x128xf32>
    %38 = arith.addf %33, %37 : vector<16x128xf32>
    %39 = vector.extract_strided_slice %18 {offsets = [4, 0], sizes = [16, 128], strides = [1, 1]} : vector<22x128xf32> to vector<16x128xf32>
    %40 = vector.extract_strided_slice %19 {offsets = [4, 0], sizes = [1, 128], strides = [1, 1]} : vector<7x128xf32> to vector<1x128xf32>
    %41 = vector.broadcast %40 : vector<1x128xf32> to vector<16x128xf32>
    %42 = arith.mulf %39, %41 : vector<16x128xf32>
    %43 = arith.addf %38, %42 : vector<16x128xf32>
    %44 = vector.extract_strided_slice %18 {offsets = [5, 0], sizes = [16, 128], strides = [1, 1]} : vector<22x128xf32> to vector<16x128xf32>
    %45 = vector.extract_strided_slice %19 {offsets = [5, 0], sizes = [1, 128], strides = [1, 1]} : vector<7x128xf32> to vector<1x128xf32>
    %46 = vector.broadcast %45 : vector<1x128xf32> to vector<16x128xf32>
    %47 = arith.mulf %44, %46 : vector<16x128xf32>
    %48 = arith.addf %43, %47 : vector<16x128xf32>
    %49 = vector.extract_strided_slice %18 {offsets = [6, 0], sizes = [16, 128], strides = [1, 1]} : vector<22x128xf32> to vector<16x128xf32>
    %50 = vector.extract_strided_slice %19 {offsets = [6, 0], sizes = [1, 128], strides = [1, 1]} : vector<7x128xf32> to vector<1x128xf32>
    %51 = vector.broadcast %50 : vector<1x128xf32> to vector<16x128xf32>
    %52 = arith.mulf %49, %51 : vector<16x128xf32>
    %53 = arith.addf %48, %52 : vector<16x128xf32>
    %c0_9 = arith.constant 0 : index
    %c0_10 = arith.constant 0 : index
    %54 = vector.load %arg4[%c0_9, %c0_10] : memref<1x128xf32, #tpu.memory_space<vmem>>, vector<1x128xf32>
    %55 = vector.broadcast %54 : vector<1x128xf32> to vector<16x128xf32>
    %56 = arith.addf %53, %55 : vector<16x128xf32>
    %cst = arith.constant dense<0.000000e+00> : vector<16xf32>
    %57 = vector.multi_reduction <add>, %56, %cst [1] : vector<16x128xf32> to vector<16xf32>
    %58 = vector.shape_cast %57 : vector<16xf32> to vector<16x1xf32>
    %cst_11 = arith.constant 1.250000e-01 : f32
    %59 = vector.broadcast %cst_11 : f32 to vector<16x1xf32>
    %60 = arith.mulf %58, %59 : vector<16x1xf32>
    %61 = vector.broadcast %60 : vector<16x1xf32> to vector<16x128xf32>
    %62 = arith.subf %56, %61 : vector<16x128xf32>
    %63 = tpu.iota {dimensions = array<i32: 1>} : vector<1x128xi32>
    %c8_i32 = arith.constant 8 : i32
    %64 = vector.broadcast %c8_i32 : i32 to vector<1x128xi32>
    %65 = arith.cmpi slt, %63, %64 : vector<1x128xi32>
    %cst_12 = arith.constant 0.000000e+00 : f32
    %66 = vector.shape_cast %65 : vector<1x128xi1> to vector<1x128xi1>
    %67 = vector.broadcast %66 : vector<1x128xi1> to vector<16x128xi1>
    %68 = vector.broadcast %cst_12 : f32 to vector<16x128xf32>
    %69 = arith.select %67, %62, %68 : vector<16x128xi1>, vector<16x128xf32>
    %70 = arith.mulf %69, %69 : vector<16x128xf32>
    %cst_13 = arith.constant dense<0.000000e+00> : vector<16xf32>
    %71 = vector.multi_reduction <add>, %70, %cst_13 [1] : vector<16x128xf32> to vector<16xf32>
    %72 = vector.shape_cast %71 : vector<16xf32> to vector<16x1xf32>
    %cst_14 = arith.constant 1.250000e-01 : f32
    %73 = vector.broadcast %cst_14 : f32 to vector<16x1xf32>
    %74 = arith.mulf %72, %73 : vector<16x1xf32>
    %cst_15 = arith.constant 9.99999997E-7 : f32
    %75 = vector.broadcast %cst_15 : f32 to vector<16x1xf32>
    %76 = arith.addf %74, %75 : vector<16x1xf32>
    %77 = math.rsqrt %76 : vector<16x1xf32>
    %78 = vector.broadcast %77 : vector<16x1xf32> to vector<16x128xf32>
    %79 = arith.mulf %62, %78 : vector<16x128xf32>
    %c0_16 = arith.constant 0 : index
    %c0_17 = arith.constant 0 : index
    %80 = vector.load %arg5[%c0_16, %c0_17] : memref<1x128xf32, #tpu.memory_space<vmem>>, vector<1x128xf32>
    %81 = vector.broadcast %80 : vector<1x128xf32> to vector<16x128xf32>
    %82 = arith.mulf %79, %81 : vector<16x128xf32>
    %c0_18 = arith.constant 0 : index
    %c0_19 = arith.constant 0 : index
    %83 = vector.load %arg6[%c0_18, %c0_19] : memref<1x128xf32, #tpu.memory_space<vmem>>, vector<1x128xf32>
    %84 = vector.broadcast %83 : vector<1x128xf32> to vector<16x128xf32>
    %85 = arith.addf %82, %84 : vector<16x128xf32>
    %86 = arith.truncf %85 : vector<16x128xf32> to vector<16x128xbf16>
    %c0_20 = arith.constant 0 : index
    %c0_21 = arith.constant 0 : index
    %87 = vector.load %arg7[%c0_20, %c0_21] : memref<128x128xbf16, #tpu.memory_space<vmem>>, vector<128x128xbf16>
    %cst_22 = arith.constant dense<0.000000e+00> : vector<16x128xf32>
    %88 = tpu.matmul %86, %87, %cst_22 {dimension_numbers = #tpu.dot_dimension_numbers<[1], [0], [0], [1], [0, 0, 1, 1], [], []>} : vector<16x128xbf16>, vector<128x128xbf16>, vector<16x128xf32> -> vector<16x128xf32>
    %c0_23 = arith.constant 0 : index
    %c0_24 = arith.constant 0 : index
    %89 = vector.load %arg8[%c0_23, %c0_24] : memref<1x128xf32, #tpu.memory_space<vmem>>, vector<1x128xf32>
    %90 = vector.broadcast %89 : vector<1x128xf32> to vector<16x128xf32>
    %91 = arith.addf %88, %90 : vector<16x128xf32>
    %cst_25 = arith.constant 5.000000e-01 : f32
    %92 = vector.broadcast %cst_25 : f32 to vector<16x128xf32>
    %93 = arith.mulf %92, %91 : vector<16x128xf32>
    %cst_26 = arith.constant 0.707106769 : f32
    %94 = vector.broadcast %cst_26 : f32 to vector<16x128xf32>
    %95 = arith.mulf %91, %94 : vector<16x128xf32>
    %96 = math.erf %95 : vector<16x128xf32>
    %cst_27 = arith.constant 1.000000e+00 : f32
    %97 = vector.broadcast %cst_27 : f32 to vector<16x128xf32>
    %98 = arith.addf %97, %96 : vector<16x128xf32>
    %99 = arith.mulf %93, %98 : vector<16x128xf32>
    %100 = arith.truncf %99 : vector<16x128xf32> to vector<16x128xbf16>
    %c0_28 = arith.constant 0 : index
    %c0_29 = arith.constant 0 : index
    %101 = vector.load %arg9[%c0_28, %c0_29] : memref<128x128xbf16, #tpu.memory_space<vmem>>, vector<128x128xbf16>
    %cst_30 = arith.constant dense<0.000000e+00> : vector<16x128xf32>
    %102 = tpu.matmul %100, %101, %cst_30 {dimension_numbers = #tpu.dot_dimension_numbers<[1], [0], [0], [1], [0, 0, 1, 1], [], []>} : vector<16x128xbf16>, vector<128x128xbf16>, vector<16x128xf32> -> vector<16x128xf32>
    %c0_31 = arith.constant 0 : index
    %c0_32 = arith.constant 0 : index
    %103 = vector.load %arg10[%c0_31, %c0_32] : memref<1x128xf32, #tpu.memory_space<vmem>>, vector<1x128xf32>
    %104 = vector.broadcast %103 : vector<1x128xf32> to vector<16x128xf32>
    %105 = arith.addf %102, %104 : vector<16x128xf32>
    %106 = vector.extract_strided_slice %18 {offsets = [3, 0], sizes = [16, 128], strides = [1, 1]} : vector<22x128xf32> to vector<16x128xf32>
    %107 = arith.addf %106, %105 : vector<16x128xf32>
    %c0_33 = arith.constant 0 : index
    %c0_34 = arith.constant 0 : index
    %c0_35 = arith.constant 0 : index
    %108 = vector.load %arg11[%c0_33, %c0_34, %c0_35] : memref<1x16x128xf32, #tpu.memory_space<vmem>>, vector<1x16x128xf32>
    %109 = vector.shape_cast %108 : vector<1x16x128xf32> to vector<16x128xf32>
    %110 = vector.shape_cast %107 : vector<16x128xf32> to vector<1x16x128xf32>
    tpu.vector_store %arg11[%c0_33, %c0_34, %c0_35], %110 {strides = array<i32>} : memref<1x16x128xf32, #tpu.memory_space<vmem>>, vector<1x16x128xf32>,
    return
  }
  func.func @transform_1(%arg0: i32, %arg1: i32) -> (i32, i32) {
    %c0_i32 = arith.constant 0 : i32
    %c0_i32_0 = arith.constant 0 : i32
    %c0_i32_1 = arith.constant 0 : i32
    return %c0_i32, %c0_i32_0 : i32, i32
  }
  func.func @transform_2(%arg0: i32, %arg1: i32) -> (i32, i32) {
    %c0_i32 = arith.constant 0 : i32
    %c0_i32_0 = arith.constant 0 : i32
    %c0_i32_1 = arith.constant 0 : i32
    return %c0_i32, %c0_i32_0 : i32, i32
  }
  func.func @transform_3(%arg0: i32, %arg1: i32) -> (i32, i32) {
    %c0_i32 = arith.constant 0 : i32
    %c0_i32_0 = arith.constant 0 : i32
    %c0_i32_1 = arith.constant 0 : i32
    return %c0_i32, %c0_i32_0 : i32, i32
  }
  func.func @transform_4(%arg0: i32, %arg1: i32) -> (i32, i32) {
    %c0_i32 = arith.constant 0 : i32
    %c0_i32_0 = arith.constant 0 : i32
    %c0_i32_1 = arith.constant 0 : i32
    return %c0_i32, %c0_i32_0 : i32, i32
  }
  func.func @transform_5(%arg0: i32, %arg1: i32) -> (i32, i32) {
    %c0_i32 = arith.constant 0 : i32
    %c0_i32_0 = arith.constant 0 : i32
    %c0_i32_1 = arith.constant 0 : i32
    return %c0_i32, %c0_i32_0 : i32, i32
  }
  func.func @transform_6(%arg0: i32, %arg1: i32) -> (i32, i32) {
    %c0_i32 = arith.constant 0 : i32
    %c0_i32_0 = arith.constant 0 : i32
    %c0_i32_1 = arith.constant 0 : i32
    return %c0_i32, %c0_i32_0 : i32, i32
  }
  func.func @transform_7(%arg0: i32, %arg1: i32) -> (i32, i32) {
    %c0_i32 = arith.constant 0 : i32
    %c0_i32_0 = arith.constant 0 : i32
    %c0_i32_1 = arith.constant 0 : i32
    return %c0_i32, %c0_i32_0 : i32, i32
  }
  func.func @transform_8(%arg0: i32, %arg1: i32) -> (i32, i32) {
    %c0_i32 = arith.constant 0 : i32
    %c0_i32_0 = arith.constant 0 : i32
    %c0_i32_1 = arith.constant 0 : i32
    return %c0_i32, %c0_i32_0 : i32, i32
  }
  func.func @transform_9(%arg0: i32, %arg1: i32) -> (i32, i32, i32) {
    %c0_i32 = arith.constant 0 : i32
    %c0_i32_0 = arith.constant 0 : i32
    return %arg0, %arg1, %c0_i32 : i32, i32, i32
  }
}

</mosaic_0001>

<llo_original>
// kernel: tpu_custom_call.1
$region0: #{tpu_custom_call.1}
  #allocation0 [shape = 'u32[]', space=smem, size = 0x4, offset = 0x4, fixed_abs, tag = 'smem constant byte address 0x4 - core index']
  #allocation1 [shape = 'u32[144,128]{1,0:T(1,128)}', space=vmem, size = 0x12000, scoped, tag = 'internal scratch']
  #allocation2 [shape = 'f32[2,22,128]{2,1,0:T(8,128)}', space=vmem, size = 0x6000, scoped, tag = 'scratch operand']
  #allocation3 [shape = 's32[2]{0}', space=sflag, size = 0x8, scoped, tag = 'scratch operand']
  #allocation6 [shape = 's32[]', space=sflag, size = 0x4, offset = 0, fixed_abs, tag = 'sflag constant byte address 0x0 - dummy sync flag']
  #allocation7 [shape = 's32[]', space=sflag, size = 0x4, offset = 0, fixed_abs, tag = 'sflag constant byte address 0x0 - dummy sync flag']
  %s0 = inlined_call_operand.vmem [shape: f32[2,54,128], index: 0, kind: input, shape index: {}]
  %s1 = inlined_call_operand.vmem [shape: f32[7,128], index: 1, kind: input, shape index: {}]
  %s2 = inlined_call_operand.vmem [shape: f32[1,128], index: 2, kind: input, shape index: {}]
  %s3 = inlined_call_operand.vmem [shape: f32[1,128], index: 3, kind: input, shape index: {}]
  %s4 = inlined_call_operand.vmem [shape: f32[1,128], index: 4, kind: input, shape index: {}]
  %s5 = inlined_call_operand.vmem [shape: bf16[128,128], index: 5, kind: input, shape index: {}]
  %s6 = inlined_call_operand.vmem [shape: f32[1,128], index: 6, kind: input, shape index: {}]
  %s7 = inlined_call_operand.vmem [shape: bf16[128,128], index: 7, kind: input, shape index: {}]
  %s8 = inlined_call_operand.vmem [shape: f32[1,128], index: 8, kind: input, shape index: {}]
  %s9 = inlined_call_operand.hbm [shape: f32[2,48,128], index: 9, kind: output, shape index: {}]
  %s10 = sld [smem:[#allocation0]]
  $region147: #{tpu_custom_call.1} parent=0
    _
  %s12 = ssub.s32 1, %s10
  %s13 = scalar_select 0, %s12, %s10
  $region1: #{tpu_custom_call.1} parent=0
    #allocation4 [shape = 'u8[16384]{0}', space=vmem, size = 0x4000, scoped, tag = 'output window, operand 0']
    #allocation5 [shape = 's32[2]{0}', space=sflag, size = 0x8, scoped, tag = 'scoped memory for tpu_custom_call.1']
    %14 = vsyncpa [#allocation5], 0
    %s15 = scalar_lea.sflag [#allocation5], 1
    %16 = vsyncpa %s15, 0
    loop: start=0, step=1, limit=8
    $region2: #{tpu_custom_call.1} parent=1 // loop_pre_header
      _
    $region3: #{tpu_custom_call.1} parent=1 // loop_header
      %s18 = sphi 0, %s22
      %p19 = scmp.ge.s32.totalorder %s18, 8
      %s25 = sphi 0, %s37
      %s26 = sphi 0, %s33
      %s27 = sphi 0, %s25
      %s28 = sphi 0, %s26
      %s29 = sphi 0, %s27
      %s30 = sphi 0, %s28
      %s38 = sphi 0, %s38
      %s40 = sphi 0, %s38
      %s41 = sphi 0, %s40
      %s55 = sphi 0, %s41
      %s59 = sphi 0, %s59
      %s61 = sphi 0, %s59
      %s62 = sphi 0, %s61
      %s76 = sphi 0, %s62
      %s80 = sphi 0, %s80
      %s82 = sphi 0, %s80
      %s83 = sphi 0, %s82
      %s97 = sphi 0, %s83
      %s101 = sphi 0, %s101
      %s103 = sphi 0, %s101
      %s104 = sphi 0, %s103
      %s118 = sphi 0, %s104
      %s122 = sphi 0, %s122
      %s124 = sphi 0, %s122
      %s125 = sphi 0, %s124
      %s139 = sphi 0, %s125
      %s143 = sphi 0, %s143
      %s145 = sphi 0, %s143
      %s146 = sphi 0, %s145
      %s160 = sphi 0, %s146
      %s164 = sphi 0, %s164
      %s166 = sphi 0, %s164
      %s167 = sphi 0, %s166
      %s181 = sphi 0, %s167
      %s185 = sphi 0, %s185
      %s187 = sphi 0, %s185
      %s188 = sphi 0, %s187
      %s202 = sphi 0, %s188
      %s210 = sphi 0, %s212
      %s213 = sphi 0, %s210
      %s214 = sphi 0, %s213
      %s230 = sphi 0, %s214
    $region4: #{tpu_custom_call.1} parent=1 // loop_header_branch
      %21 = sbr.rel (%p19) target = $region8
    $region5: #{tpu_custom_call.1} parent=1 // loop_body
      %s23 = ssub.s32 %s18, 1
      %s24 = ssub.s32 %s18, 2
      %s31 = sadd.s32 1, %s26
      %p32 = scmp.ge.s32.totalorder %s31, 3
      %s33 = scalar_select %p32, 0, %s31
      %s34 = sadd.s32 1, %s25
      %s35 = scalar_select %p32, %s34, %s25
      %p36 = scmp.ge.s32.totalorder %s35, 2
      %s37 = scalar_select %p36, 0, %s35
      %s39 = sadd.s32 %s38, 1
      %p42 = scmp.eq.s32.totalorder %s18, 5
      %p43 = scmp.ne.s32.totalorder %s38, %s40
      %p44 = scmp.eq.s32.totalorder %s18, 0
      %p45 = por %p43, %p44
      %p46 = scmp.ne.s32.totalorder %s38, %s40
      %p47 = scmp.eq.s32.totalorder %s23, 5
      %p48 = por %p46, %p47
      %p49 = scmp.ne.s32.totalorder %s40, %s41
      %p50 = scmp.eq.s32.totalorder %s23, 0
      %p51 = por %p49, %p50
      %p52 = scmp.ne.s32.totalorder %s40, %s41
      %p53 = scmp.eq.s32.totalorder %s24, 5
      %p54 = por %p52, %p53
      %p56 = scmp.ne.s32.totalorder %s41, %s55
      %p57 = scmp.eq.s32.totalorder %s24, 0
      %p58 = por %p56, %p57
      %s60 = sadd.s32 %s59, 1
      %p63 = scmp.eq.s32.totalorder %s18, 5
      %p64 = scmp.ne.s32.totalorder %s59, %s61
      %p65 = scmp.eq.s32.totalorder %s18, 0
      %p66 = por %p64, %p65
      %p67 = scmp.ne.s32.totalorder %s59, %s61
      %p68 = scmp.eq.s32.totalorder %s23, 5
      %p69 = por %p67, %p68
      %p70 = scmp.ne.s32.totalorder %s61, %s62
      %p71 = scmp.eq.s32.totalorder %s23, 0
      %p72 = por %p70, %p71
      %p73 = scmp.ne.s32.totalorder %s61, %s62
      %p74 = scmp.eq.s32.totalorder %s24, 5
      %p75 = por %p73, %p74
      %p77 = scmp.ne.s32.totalorder %s62, %s76
      %p78 = scmp.eq.s32.totalorder %s24, 0
      %p79 = por %p77, %p78
      %s81 = sadd.s32 %s80, 1
      %p84 = scmp.eq.s32.totalorder %s18, 5
      %p85 = scmp.ne.s32.totalorder %s80, %s82
      %p86 = scmp.eq.s32.totalorder %s18, 0
      %p87 = por %p85, %p86
      %p88 = scmp.ne.s32.totalorder %s80, %s82
      %p89 = scmp.eq.s32.totalorder %s23, 5
      %p90 = por %p88, %p89
      %p91 = scmp.ne.s32.totalorder %s82, %s83
      %p92 = scmp.eq.s32.totalorder %s23, 0
      %p93 = por %p91, %p92
      %p94 = scmp.ne.s32.totalorder %s82, %s83
      %p95 = scmp.eq.s32.totalorder %s24, 5
      %p96 = por %p94, %p95
      %p98 = scmp.ne.s32.totalorder %s83, %s97
      %p99 = scmp.eq.s32.totalorder %s24, 0
      %p100 = por %p98, %p99
      %s102 = sadd.s32 %s101, 1
      %p105 = scmp.eq.s32.totalorder %s18, 5
      %p106 = scmp.ne.s32.totalorder %s101, %s103
      %p107 = scmp.eq.s32.totalorder %s18, 0
      %p108 = por %p106, %p107
      %p109 = scmp.ne.s32.totalorder %s101, %s103
      %p110 = scmp.eq.s32.totalorder %s23, 5
      %p111 = por %p109, %p110
      %p112 = scmp.ne.s32.totalorder %s103, %s104
      %p113 = scmp.eq.s32.totalorder %s23, 0
      %p114 = por %p112, %p113
      %p115 = scmp.ne.s32.totalorder %s103, %s104
      %p116 = scmp.eq.s32.totalorder %s24, 5
      %p117 = por %p115, %p116
      %p119 = scmp.ne.s32.totalorder %s104, %s118
      %p120 = scmp.eq.s32.totalorder %s24, 0
      %p121 = por %p119, %p120
      %s123 = sadd.s32 %s122, 1
      %p126 = scmp.eq.s32.totalorder %s18, 5
      %p127 = scmp.ne.s32.totalorder %s122, %s124
      %p128 = scmp.eq.s32.totalorder %s18, 0
      %p129 = por %p127, %p128
      %p130 = scmp.ne.s32.totalorder %s122, %s124
      %p131 = scmp.eq.s32.totalorder %s23, 5
      %p132 = por %p130, %p131
      %p133 = scmp.ne.s32.totalorder %s124, %s125
      %p134 = scmp.eq.s32.totalorder %s23, 0
      %p135 = por %p133, %p134
      %p136 = scmp.ne.s32.totalorder %s124, %s125
      %p137 = scmp.eq.s32.totalorder %s24, 5
      %p138 = por %p136, %p137
      %p140 = scmp.ne.s32.totalorder %s125, %s139
      %p141 = scmp.eq.s32.totalorder %s24, 0
      %p142 = por %p140, %p141
      %s144 = sadd.s32 %s143, 1
      %p147 = scmp.eq.s32.totalorder %s18, 5
      %p148 = scmp.ne.s32.totalorder %s143, %s145
      %p149 = scmp.eq.s32.totalorder %s18, 0
      %p150 = por %p148, %p149
      %p151 = scmp.ne.s32.totalorder %s143, %s145
      %p152 = scmp.eq.s32.totalorder %s23, 5
      %p153 = por %p151, %p152
      %p154 = scmp.ne.s32.totalorder %s145, %s146
      %p155 = scmp.eq.s32.totalorder %s23, 0
      %p156 = por %p154, %p155
      %p157 = scmp.ne.s32.totalorder %s145, %s146
      %p158 = scmp.eq.s32.totalorder %s24, 5
      %p159 = por %p157, %p158
      %p161 = scmp.ne.s32.totalorder %s146, %s160
      %p162 = scmp.eq.s32.totalorder %s24, 0
      %p163 = por %p161, %p162
      %s165 = sadd.s32 %s164, 1
      %p168 = scmp.eq.s32.totalorder %s18, 5
      %p169 = scmp.ne.s32.totalorder %s164, %s166
      %p170 = scmp.eq.s32.totalorder %s18, 0
      %p171 = por %p169, %p170
      %p172 = scmp.ne.s32.totalorder %s164, %s166
      %p173 = scmp.eq.s32.totalorder %s23, 5
      %p174 = por %p172, %p173
      %p175 = scmp.ne.s32.totalorder %s166, %s167
      %p176 = scmp.eq.s32.totalorder %s23, 0
      %p177 = por %p175, %p176
      %p178 = scmp.ne.s32.totalorder %s166, %s167
      %p179 = scmp.eq.s32.totalorder %s24, 5
      %p180 = por %p178, %p179
      %p182 = scmp.ne.s32.totalorder %s167, %s181
      %p183 = scmp.eq.s32.totalorder %s24, 0
      %p184 = por %p182, %p183
      %s186 = sadd.s32 %s185, 1
      %p189 = scmp.eq.s32.totalorder %s18, 5
      %p190 = scmp.ne.s32.totalorder %s185, %s187
      %p191 = scmp.eq.s32.totalorder %s18, 0
      %p192 = por %p190, %p191
      %p193 = scmp.ne.s32.totalorder %s185, %s187
      %p194 = scmp.eq.s32.totalorder %s23, 5
      %p195 = por %p193, %p194
      %p196 = scmp.ne.s32.totalorder %s187, %s188
      %p197 = scmp.eq.s32.totalorder %s23, 0
      %p198 = por %p196, %p197
      %p199 = scmp.ne.s32.totalorder %s187, %s188
      %p200 = scmp.eq.s32.totalorder %s24, 5
      %p201 = por %p199, %p200
      %p203 = scmp.ne.s32.totalorder %s188, %s202
      %p204 = scmp.eq.s32.totalorder %s24, 0
      %p205 = por %p203, %p204
      %s206 = ssub.s32 %s25, %s37
      %s207 = ssub.s32 %s26, %s33
      %s208 = sor.u32 %s206, %s207
      %p209 = scmp.eq.s32.totalorder %s208, 0
      %s211 = sadd.s32 %s210, 1
      %s212 = scalar_select %p209, %s210, %s211
      %p215 = pneg %p209
      %p216 = scmp.eq.s32.totalorder %s18, 5
      %p217 = por %p215, %p216
      %p218 = scmp.ne.s32.totalorder %s210, %s213
      %p219 = scmp.eq.s32.totalorder %s18, 0
      %p220 = por %p218, %p219
      %p221 = scmp.ne.s32.totalorder %s210, %s213
      %p222 = scmp.eq.s32.totalorder %s23, 5
      %p223 = por %p221, %p222
      %p224 = scmp.ne.s32.totalorder %s213, %s214
      %p225 = scmp.eq.s32.totalorder %s23, 0
      %p226 = por %p224, %p225
      %p227 = scmp.ne.s32.totalorder %s213, %s214
      %p228 = scmp.eq.s32.totalorder %s24, 5
      %p229 = por %p227, %p228
      %p231 = scmp.ne.s32.totalorder %s214, %s230
      %p232 = scmp.eq.s32.totalorder %s24, 0
      %p233 = por %p231, %p232
      %p234 = scmp.le.s32.totalorder 1, %s18
      %p235 = scmp.lt.s32.totalorder %s18, 7
      %p236 = pnand %p234, %p235
      %p237 = pneg %p236
      // Predicated region
      $region9: #{tpu_custom_call.1} parent=5 // pred_check
        _
      $region10: #{tpu_custom_call.1} parent=5 // pred_check_branch
        %239 = sbr.rel (%p236) target = $region12
      $region11: #{tpu_custom_call.1} parent=5 // pred_region
        %s240 = ssub.s32 %s18, 1
        // Predicated region
        $region13: #{tpu_custom_call.1} parent=11 // pred_check
          %p241 = pneg %p51
        $region14: #{tpu_custom_call.1} parent=11 // pred_check_branch
          %243 = sbr.rel (%p241) target = $region16
        $region15: #{tpu_custom_call.1} parent=11 // pred_region
          _
        $region16: #{tpu_custom_call.1} parent=11 // pred_fallthru
          _
        // Predicated region
        $region17: #{tpu_custom_call.1} parent=11 // pred_check
          %p244 = pneg %p72
        $region18: #{tpu_custom_call.1} parent=11 // pred_check_branch
          %246 = sbr.rel (%p244) target = $region20
        $region19: #{tpu_custom_call.1} parent=11 // pred_region
          _
        $region20: #{tpu_custom_call.1} parent=11 // pred_fallthru
          _
        // Predicated region
        $region21: #{tpu_custom_call.1} parent=11 // pred_check
          %p247 = pneg %p93
        $region22: #{tpu_custom_call.1} parent=11 // pred_check_branch
          %249 = sbr.rel (%p247) target = $region24
        $region23: #{tpu_custom_call.1} parent=11 // pred_region
          _
        $region24: #{tpu_custom_call.1} parent=11 // pred_fallthru
          _
        // Predicated region
        $region25: #{tpu_custom_call.1} parent=11 // pred_check
          %p250 = pneg %p114
        $region26: #{tpu_custom_call.1} parent=11 // pred_check_branch
          %252 = sbr.rel (%p250) target = $region28
        $region27: #{tpu_custom_call.1} parent=11 // pred_region
          _
        $region28: #{tpu_custom_call.1} parent=11 // pred_fallthru
          _
        // Predicated region
        $region29: #{tpu_custom_call.1} parent=11 // pred_check
          %p253 = pneg %p135
        $region30: #{tpu_custom_call.1} parent=11 // pred_check_branch
          %255 = sbr.rel (%p253) target = $region32
        $region31: #{tpu_custom_call.1} parent=11 // pred_region
          _
        $region32: #{tpu_custom_call.1} parent=11 // pred_fallthru
          _
        // Predicated region
        $region33: #{tpu_custom_call.1} parent=11 // pred_check
          %p256 = pneg %p156
        $region34: #{tpu_custom_call.1} parent=11 // pred_check_branch
          %258 = sbr.rel (%p256) target = $region36
        $region35: #{tpu_custom_call.1} parent=11 // pred_region
          _
        $region36: #{tpu_custom_call.1} parent=11 // pred_fallthru
          _
        // Predicated region
        $region37: #{tpu_custom_call.1} parent=11 // pred_check
          %p259 = pneg %p177
        $region38: #{tpu_custom_call.1} parent=11 // pred_check_branch
          %261 = sbr.rel (%p259) target = $region40
        $region39: #{tpu_custom_call.1} parent=11 // pred_region
          _
        $region40: #{tpu_custom_call.1} parent=11 // pred_fallthru
          _
        // Predicated region
        $region41: #{tpu_custom_call.1} parent=11 // pred_check
          %p262 = pneg %p198
        $region42: #{tpu_custom_call.1} parent=11 // pred_check_branch
          %264 = sbr.rel (%p262) target = $region44
        $region43: #{tpu_custom_call.1} parent=11 // pred_region
          _
        $region44: #{tpu_custom_call.1} parent=11 // pred_fallthru
          _
      $region12: #{tpu_custom_call.1} parent=5 // pred_fallthru
        _
      %p265 = scmp.lt.s32.totalorder %s18, 6
      // Predicated region
      $region45: #{tpu_custom_call.1} parent=5 // pred_check
        %p266 = pneg %p265
      $region46: #{tpu_custom_call.1} parent=5 // pred_check_branch
        %268 = sbr.rel (%p266) target = $region48
      $region47: #{tpu_custom_call.1} parent=5 // pred_region
        _
      $region48: #{tpu_custom_call.1} parent=5 // pred_fallthru
        _
      %p269 = scmp.le.s32.totalorder 1, %s18
      %p270 = scmp.lt.s32.totalorder %s18, 7
      %p271 = pnand %p269, %p270
      %p272 = pneg %p271
      // Predicated region
      $region49: #{tpu_custom_call.1} parent=5 // pred_check
        _
      $region50: #{tpu_custom_call.1} parent=5 // pred_check_branch
        %274 = sbr.rel (%p271) target = $region52
      $region51: #{tpu_custom_call.1} parent=5 // pred_region
        %s275 = ssub.s32 %s18, 1
        %p276 = pneg %p51
        %p277 = pneg %p48
        %p278 = pneg %p72
        %p279 = pneg %p69
        %p280 = pneg %p93
        %p281 = pneg %p90
        %p282 = pneg %p114
        %p283 = pneg %p111
        %p284 = pneg %p135
        %p285 = pneg %p132
        %p286 = pneg %p156
        %p287 = pneg %p153
        %p288 = pneg %p177
        %p289 = pneg %p174
        %p290 = pneg %p198
        %p291 = pneg %p195
        %p292 = pneg %p226
        %p293 = pneg %p223
        %s294 = sand.u32 %s213, 1
        %s295 = scalar_lea.sflag [#allocation5], %s294
        %s296 = sand.u32 %s213, 1
        %s297 = smul.addr %s296, 16
        %s298 = scalar_lea.vmem [#allocation4], %s297
        %s299 = smul.u32 2, %s28
        %s301 = sand.u32 %s28, 1
        %p302 = scmp.eq.s32.totalorder %s28, 0
        // Predicated region
        $region53: #{tpu_custom_call.1} parent=51 // pred_check
          %p303 = pneg %p302
        $region54: #{tpu_custom_call.1} parent=51 // pred_check_branch
          %305 = sbr.rel (%p303) target = $region56
        $region55: #{tpu_custom_call.1} parent=51 // pred_region
          %s306 = smul.u32 %s28, 16
          %s307 = smul.u32 %s27, 56
          %s308 = sadd.s32 %s306, %s307
          %s309 = scalar_lea.vmem %s0, %s308
          %s310 = smul.u32 %s301, 24
          %s311 = scalar_lea.vmem [#allocation2], %s310
          %s312 = scalar_lea.sflag [#allocation3], %s301
          %p314 = scmp.lt.u32.totalorder 22, 8
          %p315 = pneg %p314
          // Predicated region
          $region57: #{tpu_custom_call.1} parent=55 // pred_check
            _
          $region58: #{tpu_custom_call.1} parent=55 // pred_check_branch
            %317 = sbr.rel (%p314) target = $region60
          $region59: #{tpu_custom_call.1} parent=55 // pred_region
            %s333 = sand.u32 22, 7
            %p334 = scmp.eq.s32.totalorder %s333, 0
            %p335 = pneg %p334
            // Predicated region
            $region72: #{tpu_custom_call.1} parent=59 // pred_check
              _
            $region73: #{tpu_custom_call.1} parent=59 // pred_check_branch
              %337 = sbr.rel (%p334) target = $region75
            $region74: #{tpu_custom_call.1} parent=59 // pred_region
              %s338 = sand.u32 22, 7
              %s339 = ssub.s32 22, %s338
              %s340 = scalar_lea.vmem %s309, %s339
              %s341 = ssub.s32 22, %s338
              %s342 = scalar_lea.vmem %s311, %s341 [#allocation2]
              loop: start=0, step=1, limit=1
              $region76: #{tpu_custom_call.1} parent=74 // loop_pre_header
                _
              $region77: #{tpu_custom_call.1} parent=74 // loop_header
                %s344 = sphi 0, %s348
                %p345 = scmp.ge.s32.totalorder %s344, 1
                %s349 = sphi %s309, %s309
                %s350 = sphi %s311, %s311
              $region78: #{tpu_custom_call.1} parent=74 // loop_header_branch
                %347 = sbr.rel (%p345) target = $region82
              $region79: #{tpu_custom_call.1} parent=74 // loop_body
                %v351 = vld [vmem:[%s349] sm:$0xff]
                %352 = vst [vmem:[%s350] sm:$0xff] %v351
                %v353 = vld [vmem:[%s349 + $0x8] sm:$0xff]
                %354 = vst [vmem:[%s350 + $0x8] sm:$0xff] %v353
              $region80: #{tpu_custom_call.1} parent=74 // loop_footer
                %s348 = sadd.s32 1, %s344
              $region81: #{tpu_custom_call.1} parent=74 // loop_footer_branch
                %343 = sbr.rel target = $region77
              $region82: #{tpu_custom_call.1} parent=74 // loop_exit
                _
              %s355 = sshll.u32 1, %s338
              %s356 = ssub.s32 %s355, 1
              loop: start=0, step=1, limit=1
              $region83: #{tpu_custom_call.1} parent=74 // loop_pre_header
                _
              $region84: #{tpu_custom_call.1} parent=74 // loop_header
                %s358 = sphi 0, %s362
                %p359 = scmp.ge.s32.totalorder %s358, 1
                %s363 = sphi %s340, %s340
                %s364 = sphi %s342, %s342
              $region85: #{tpu_custom_call.1} parent=74 // loop_header_branch
                %361 = sbr.rel (%p359) target = $region89
              $region86: #{tpu_custom_call.1} parent=74 // loop_body
                %v365 = vld [vmem:[%s363] sm:%s356]
                %366 = vst [vmem:[%s364] sm:%s356] %v365
              $region87: #{tpu_custom_call.1} parent=74 // loop_footer
                %s362 = sadd.s32 1, %s358
              $region88: #{tpu_custom_call.1} parent=74 // loop_footer_branch
                %357 = sbr.rel target = $region84
              $region89: #{tpu_custom_call.1} parent=74 // loop_exit
                _
            $region75: #{tpu_custom_call.1} parent=59 // pred_fallthru
              _
          $region60: #{tpu_custom_call.1} parent=55 // pred_fallthru
            _
          // Predicated region
          $region61: #{tpu_custom_call.1} parent=55 // pred_check
            %p318 = pneg %p314
          $region62: #{tpu_custom_call.1} parent=55 // pred_check_branch
            %320 = sbr.rel (%p318) target = $region64
          $region63: #{tpu_custom_call.1} parent=55 // pred_region
            %s321 = sshll.u32 1, 22
            %s322 = ssub.s32 %s321, 1
            loop: start=0, step=1, limit=1
            $region65: #{tpu_custom_call.1} parent=63 // loop_pre_header
              _
            $region66: #{tpu_custom_call.1} parent=63 // loop_header
              %s324 = sphi 0, %s328
              %p325 = scmp.ge.s32.totalorder %s324, 1
              %s329 = sphi %s309, %s309
              %s330 = sphi %s311, %s311
            $region67: #{tpu_custom_call.1} parent=63 // loop_header_branch
              %327 = sbr.rel (%p325) target = $region71
            $region68: #{tpu_custom_call.1} parent=63 // loop_body
              %v331 = vld [vmem:[%s329] sm:%s322]
              %332 = vst [vmem:[%s330] sm:%s322] %v331
            $region69: #{tpu_custom_call.1} parent=63 // loop_footer
              %s328 = sadd.s32 1, %s324
            $region70: #{tpu_custom_call.1} parent=63 // loop_footer_branch
              %323 = sbr.rel target = $region66
            $region71: #{tpu_custom_call.1} parent=63 // loop_exit
              _
          $region64: #{tpu_custom_call.1} parent=55 // pred_fallthru
            _
          // Predicated region
          $region90: #{tpu_custom_call.1} parent=55 // pred_check
            _
          $region91: #{tpu_custom_call.1} parent=55 // pred_check_branch
            %369 = sbr.rel (0) target = $region93
          $region92: #{tpu_custom_call.1} parent=55 // pred_region
            %370 = vsyncadd %s312, 352
          $region93: #{tpu_custom_call.1} parent=55 // pred_fallthru
            _
        $region56: #{tpu_custom_call.1} parent=51 // pred_fallthru
          _
        %s371 = sadd.s32 %s28, 1
        %p372 = scmp.lt.s32.totalorder %s371, 3
        // Predicated region
        $region94: #{tpu_custom_call.1} parent=51 // pred_check
          %p373 = pneg %p372
        $region95: #{tpu_custom_call.1} parent=51 // pred_check_branch
          %375 = sbr.rel (%p373) target = $region97
        $region96: #{tpu_custom_call.1} parent=51 // pred_region
          %s376 = ssub.s32 1, %s301
          %s377 = smul.u32 %s371, 16
          %s378 = smul.u32 %s27, 56
          %s379 = sadd.s32 %s377, %s378
          %s380 = scalar_lea.vmem %s0, %s379
          %s381 = smul.u32 %s376, 24
          %s382 = scalar_lea.vmem [#allocation2], %s381
          %s383 = scalar_lea.sflag [#allocation3], %s376
          %p385 = scmp.lt.u32.totalorder 22, 8
          %p386 = pneg %p385
          // Predicated region
          $region98: #{tpu_custom_call.1} parent=96 // pred_check
            _
          $region99: #{tpu_custom_call.1} parent=96 // pred_check_branch
            %388 = sbr.rel (%p385) target = $region101
          $region100: #{tpu_custom_call.1} parent=96 // pred_region
            %s404 = sand.u32 22, 7
            %p405 = scmp.eq.s32.totalorder %s404, 0
            %p406 = pneg %p405
            // Predicated region
            $region113: #{tpu_custom_call.1} parent=100 // pred_check
              _
            $region114: #{tpu_custom_call.1} parent=100 // pred_check_branch
              %408 = sbr.rel (%p405) target = $region116
            $region115: #{tpu_custom_call.1} parent=100 // pred_region
              %s409 = sand.u32 22, 7
              %s410 = ssub.s32 22, %s409
              %s411 = scalar_lea.vmem %s380, %s410
              %s412 = ssub.s32 22, %s409
              %s413 = scalar_lea.vmem %s382, %s412 [#allocation2]
              loop: start=0, step=1, limit=1
              $region117: #{tpu_custom_call.1} parent=115 // loop_pre_header
                _
              $region118: #{tpu_custom_call.1} parent=115 // loop_header
                %s415 = sphi 0, %s419
                %p416 = scmp.ge.s32.totalorder %s415, 1
                %s420 = sphi %s380, %s380
                %s421 = sphi %s382, %s382
              $region119: #{tpu_custom_call.1} parent=115 // loop_header_branch
                %418 = sbr.rel (%p416) target = $region123
              $region120: #{tpu_custom_call.1} parent=115 // loop_body
                %v422 = vld [vmem:[%s420] sm:$0xff]
                %423 = vst [vmem:[%s421] sm:$0xff] %v422
                %v424 = vld [vmem:[%s420 + $0x8] sm:$0xff]
                %425 = vst [vmem:[%s421 + $0x8] sm:$0xff] %v424
              $region121: #{tpu_custom_call.1} parent=115 // loop_footer
                %s419 = sadd.s32 1, %s415
              $region122: #{tpu_custom_call.1} parent=115 // loop_footer_branch
                %414 = sbr.rel target = $region118
              $region123: #{tpu_custom_call.1} parent=115 // loop_exit
                _
              %s426 = sshll.u32 1, %s409
              %s427 = ssub.s32 %s426, 1
              loop: start=0, step=1, limit=1
              $region124: #{tpu_custom_call.1} parent=115 // loop_pre_header
                _
              $region125: #{tpu_custom_call.1} parent=115 // loop_header
                %s429 = sphi 0, %s433
                %p430 = scmp.ge.s32.totalorder %s429, 1
                %s434 = sphi %s411, %s411
                %s435 = sphi %s413, %s413
              $region126: #{tpu_custom_call.1} parent=115 // loop_header_branch
                %432 = sbr.rel (%p430) target = $region130
              $region127: #{tpu_custom_call.1} parent=115 // loop_body
                %v436 = vld [vmem:[%s434] sm:%s427]
                %437 = vst [vmem:[%s435] sm:%s427] %v436
              $region128: #{tpu_custom_call.1} parent=115 // loop_footer
                %s433 = sadd.s32 1, %s429
              $region129: #{tpu_custom_call.1} parent=115 // loop_footer_branch
                %428 = sbr.rel target = $region125
              $region130: #{tpu_custom_call.1} parent=115 // loop_exit
                _
            $region116: #{tpu_custom_call.1} parent=100 // pred_fallthru
              _
          $region101: #{tpu_custom_call.1} parent=96 // pred_fallthru
            _
          // Predicated region
          $region102: #{tpu_custom_call.1} parent=96 // pred_check
            %p389 = pneg %p385
          $region103: #{tpu_custom_call.1} parent=96 // pred_check_branch
            %391 = sbr.rel (%p389) target = $region105
          $region104: #{tpu_custom_call.1} parent=96 // pred_region
            %s392 = sshll.u32 1, 22
            %s393 = ssub.s32 %s392, 1
            loop: start=0, step=1, limit=1
            $region106: #{tpu_custom_call.1} parent=104 // loop_pre_header
              _
            $region107: #{tpu_custom_call.1} parent=104 // loop_header
              %s395 = sphi 0, %s399
              %p396 = scmp.ge.s32.totalorder %s395, 1
              %s400 = sphi %s380, %s380
              %s401 = sphi %s382, %s382
            $region108: #{tpu_custom_call.1} parent=104 // loop_header_branch
              %398 = sbr.rel (%p396) target = $region112
            $region109: #{tpu_custom_call.1} parent=104 // loop_body
              %v402 = vld [vmem:[%s400] sm:%s393]
              %403 = vst [vmem:[%s401] sm:%s393] %v402
            $region110: #{tpu_custom_call.1} parent=104 // loop_footer
              %s399 = sadd.s32 1, %s395
            $region111: #{tpu_custom_call.1} parent=104 // loop_footer_branch
              %394 = sbr.rel target = $region107
            $region112: #{tpu_custom_call.1} parent=104 // loop_exit
              _
          $region105: #{tpu_custom_call.1} parent=96 // pred_fallthru
            _
          // Predicated region
          $region131: #{tpu_custom_call.1} parent=96 // pred_check
            _
          $region132: #{tpu_custom_call.1} parent=96 // pred_check_branch
            %440 = sbr.rel (0) target = $region134
          $region133: #{tpu_custom_call.1} parent=96 // pred_region
            %441 = vsyncadd %s383, 352
          $region134: #{tpu_custom_call.1} parent=96 // pred_fallthru
            _
        $region97: #{tpu_custom_call.1} parent=51 // pred_fallthru
          _
        %s442 = smul.u32 %s28, 16
        %s443 = smul.u32 %s301, 24
        %s444 = scalar_lea.vmem [#allocation2], %s443
        %s445 = scalar_lea.sflag [#allocation3], %s301
        %s446 = smul.u32 22, 1
        %s447 = sshll.u32 %s446, 4
        %448 = dma.done %s445, %s447
        %v449 = vld [vmem:[%s444] sm:$0xff]
        %v450 = vld [vmem:[%s444 + $0x8] sm:$0xff]
        %v451 = vld [vmem:[%s444 + $0x10] sm:$0x3f]
        %v452 = vld [vmem:[%s1] sm:$0x7f]
        %v453 = vlaneseq
        %v454 = vshrl.u32 %v453, 7
        %v455 = vsub.s32 0, %v454
        %v456 = vrot.slane %v452, %v455
        %v457 = vmul.f32 %v449, %v456
        %v458 = vmul.f32 %v450, %v456
        %v459 = vlaneseq
        %v460 = vshrl.u32 %v459, 7
        %v461 = vsub.s32 1, %v460
        %v462 = vrot.slane %v452, %v461
        %v463 = vmul.f32 %v449, %v462
        %v464 = vmul.f32 %v450, %v462
        %v465 = vmul.f32 %v451, %v462
        %vm469 = vcmask 1046528
        %v470 = vrot.slane %v463, 1
        %v471 = vrot.slane %v464, 1
        %v472 = vsel %vm469, %v470, %v471
        %v473 = vrot.slane %v465, 1
        %v474 = vsel %vm469, %v471, %v473
        %v477 = vadd.f32 %v457, %v472
        %v478 = vadd.f32 %v458, %v474
        %v479 = vlaneseq
        %v480 = vshrl.u32 %v479, 7
        %v481 = vsub.s32 2, %v480
        %v482 = vrot.slane %v452, %v481
        %v483 = vmul.f32 %v449, %v482
        %v484 = vmul.f32 %v450, %v482
        %v485 = vmul.f32 %v451, %v482
        %vm489 = vcmask 1045504
        %v490 = vrot.slane %v483, 2
        %v491 = vrot.slane %v484, 2
        %v492 = vsel %vm489, %v490, %v491
        %v493 = vrot.slane %v485, 2
        %v494 = vsel %vm489, %v491, %v493
        %v497 = vadd.f32 %v477, %v492
        %v498 = vadd.f32 %v478, %v494
        %v499 = vlaneseq
        %v500 = vshrl.u32 %v499, 7
        %v501 = vsub.s32 3, %v500
        %v502 = vrot.slane %v452, %v501
        %v503 = vmul.f32 %v449, %v502
        %v504 = vmul.f32 %v450, %v502
        %v505 = vmul.f32 %v451, %v502
        %vm509 = vcmask 1044480
        %v510 = vrot.slane %v503, 3
        %v511 = vrot.slane %v504, 3
        %v512 = vsel %vm509, %v510, %v511
        %v513 = vrot.slane %v505, 3
        %v514 = vsel %vm509, %v511, %v513
        %v517 = vadd.f32 %v497, %v512
        %v518 = vadd.f32 %v498, %v514
        %v519 = vlaneseq
        %v520 = vshrl.u32 %v519, 7
        %v521 = vsub.s32 4, %v520
        %v522 = vrot.slane %v452, %v521
        %v523 = vmul.f32 %v449, %v522
        %v524 = vmul.f32 %v450, %v522
        %v525 = vmul.f32 %v451, %v522
        %vm529 = vcmask 1043456
        %v530 = vrot.slane %v523, 4
        %v531 = vrot.slane %v524, 4
        %v532 = vsel %vm529, %v530, %v531
        %v533 = vrot.slane %v525, 4
        %v534 = vsel %vm529, %v531, %v533
        %v537 = vadd.f32 %v517, %v532
        %v538 = vadd.f32 %v518, %v534
        %v539 = vlaneseq
        %v540 = vshrl.u32 %v539, 7
        %v541 = vsub.s32 5, %v540
        %v542 = vrot.slane %v452, %v541
        %v543 = vmul.f32 %v449, %v542
        %v544 = vmul.f32 %v450, %v542
        %v545 = vmul.f32 %v451, %v542
        %vm549 = vcmask 1042432
        %v550 = vrot.slane %v543, 5
        %v551 = vrot.slane %v544, 5
        %v552 = vsel %vm549, %v550, %v551
        %v553 = vrot.slane %v545, 5
        %v554 = vsel %vm549, %v551, %v553
        %v557 = vadd.f32 %v537, %v552
        %v558 = vadd.f32 %v538, %v554
        %v559 = vlaneseq
        %v560 = vshrl.u32 %v559, 7
        %v561 = vsub.s32 6, %v560
        %v562 = vrot.slane %v452, %v561
        %v563 = vmul.f32 %v449, %v562
        %v564 = vmul.f32 %v450, %v562
        %v565 = vmul.f32 %v451, %v562
        %vm569 = vcmask 1041408
        %v570 = vrot.slane %v563, 6
        %v571 = vrot.slane %v564, 6
        %v572 = vsel %vm569, %v570, %v571
        %v573 = vrot.slane %v565, 6
        %v574 = vsel %vm569, %v571, %v573
        %v577 = vadd.f32 %v557, %v572
        %v578 = vadd.f32 %v558, %v574
        %v579 = vld [vmem:[%s2] sm:$0x1]
        %v581 = vlaneseq
        %v582 = vshrl.u32 %v581, 7
        %v583 = vsub.s32 0, %v582
        %v584 = vrot.slane %v579, %v583
        %v586 = vadd.f32 %v577, %v584
        %v587 = vadd.f32 %v578, %v584
        %588 = vadd.xlane.f32.xlu0 %v586
        %v589 = vpop.xlane.xlu0 %588
        %590 = vadd.xlane.f32.xlu0 %v587
        %v591 = vpop.xlane.xlu0 %590
        %v592 = vmul.f32 %v589, 0.125
        %v593 = vmul.f32 %v591, 0.125
        %v594 = vsub.f32 %v586, %v592
        %v595 = vsub.f32 %v587, %v593
        %v596 = vlaneseq
        %v597 = vand.u32 %v596, 127
        %vm598 = vcmp.lt.s32.totalorder %v597, 8
        %v599 = vsel %vm598, 1, 0
        %vm600 = vcmp.eq.s32.totalorder %v599, 1
        %v601 = vsel %vm600, %v594, 0.0
        %v602 = vsel %vm600, %v595, 0.0
        %v603 = vmul.f32 %v601, %v601
        %v604 = vmul.f32 %v602, %v602
        %605 = vadd.xlane.f32.xlu0 %v603
        %v606 = vpop.xlane.xlu0 %605
        %607 = vadd.xlane.f32.xlu0 %v604
        %v608 = vpop.xlane.xlu0 %607
        %v609 = vmul.f32 %v606, 0.125
        %v610 = vmul.f32 %v608, 0.125
        %v611 = vadd.f32 %v609, 1e-06
        %v612 = vadd.f32 %v610, 1e-06
        %v613 = vrsqrt.pop %v611
        %v614 = vrsqrt.pop %v612
        %v615 = vmul.f32 %v594, %v613
        %v616 = vmul.f32 %v595, %v614
        %v617 = vld [vmem:[%s3] sm:$0x1]
        %v619 = vlaneseq
        %v620 = vshrl.u32 %v619, 7
        %v621 = vsub.s32 0, %v620
        %v622 = vrot.slane %v617, %v621
        %v624 = vmul.f32 %v615, %v622
        %v625 = vmul.f32 %v616, %v622
        %v626 = vld [vmem:[%s4] sm:$0x1]
        %v628 = vlaneseq
        %v629 = vshrl.u32 %v628, 7
        %v630 = vsub.s32 0, %v629
        %v631 = vrot.slane %v626, %v630
        %v633 = vadd.f32 %v624, %v631
        %v634 = vadd.f32 %v625, %v631
        %v635 = vpack.c.bf16 %v634, %v633
        %v636 = vld [vmem:[%s5] sm:$0xf]
        %v637 = vld [vmem:[%s5 + $0x4] sm:$0xf]
        %v638 = vld [vmem:[%s5 + $0x8] sm:$0xf]
        %v639 = vld [vmem:[%s5 + $0xc] sm:$0xf]
        %v640 = vld [vmem:[%s5 + $0x10] sm:$0xf]
        %v641 = vld [vmem:[%s5 + $0x14] sm:$0xf]
        %v642 = vld [vmem:[%s5 + $0x18] sm:$0xf]
        %v643 = vld [vmem:[%s5 + $0x1c] sm:$0xf]
        %v644 = vld [vmem:[%s5 + $0x20] sm:$0xf]
        %v645 = vld [vmem:[%s5 + $0x24] sm:$0xf]
        %v646 = vld [vmem:[%s5 + $0x28] sm:$0xf]
        %v647 = vld [vmem:[%s5 + $0x2c] sm:$0xf]
        %v648 = vld [vmem:[%s5 + $0x30] sm:$0xf]
        %v649 = vld [vmem:[%s5 + $0x34] sm:$0xf]
        %v650 = vld [vmem:[%s5 + $0x38] sm:$0xf]
        %v651 = vld [vmem:[%s5 + $0x3c] sm:$0xf]
        %v652 = vld [vmem:[%s6] sm:$0x1]
        %v654 = vlaneseq
        %v655 = vshrl.u32 %v654, 7
        %v656 = vsub.s32 0, %v655
        %v657 = vrot.slane %v652, %v656
        %v675 = vunpack.c.l.b16 %v636
        %v676 = vunpack.c.l.b16 %v637
        %v677 = vunpack.c.l.b16 %v638
        %v678 = vunpack.c.l.b16 %v639
        %v679 = vunpack.c.l.b16 %v640
        %v680 = vunpack.c.l.b16 %v641
        %v681 = vunpack.c.l.b16 %v642
        %v682 = vunpack.c.l.b16 %v643
        %v683 = vunpack.c.l.b16 %v644
        %v684 = vunpack.c.l.b16 %v645
        %v685 = vunpack.c.l.b16 %v646
        %v686 = vunpack.c.l.b16 %v647
        %v687 = vunpack.c.l.b16 %v648
        %v688 = vunpack.c.l.b16 %v649
        %v689 = vunpack.c.l.b16 %v650
        %v690 = vunpack.c.l.b16 %v651
        %v691 = vpack.c.b16 %v676, %v675
        %v692 = vpack.c.b16 %v678, %v677
        %v693 = vpack.c.b16 %v680, %v679
        %v694 = vpack.c.b16 %v682, %v681
        %v695 = vpack.c.b16 %v684, %v683
        %v696 = vpack.c.b16 %v686, %v685
        %v697 = vpack.c.b16 %v688, %v687
        %v698 = vpack.c.b16 %v690, %v689
        %707 = vmatprep.subr.bf16.mxu0 0
        %708 = vmatpush1.bf16.msra.mxu0 %v698
        %709 = vmatprep.subr.bf16.mxu0 0
        %710 = vmatpush1.bf16.msra.mxu0 %v697
        %711 = vmatprep.subr.bf16.mxu0 0
        %712 = vmatpush1.bf16.msra.mxu0 %v696
        %713 = vmatprep.subr.bf16.mxu0 0
        %714 = vmatpush1.bf16.msra.mxu0 %v695
        %715 = vmatprep.subr.bf16.mxu0 0
        %716 = vmatpush1.bf16.msra.mxu0 %v694
        %717 = vmatprep.subr.bf16.mxu0 0
        %718 = vmatpush1.bf16.msra.mxu0 %v693
        %719 = vmatprep.subr.bf16.mxu0 0
        %720 = vmatpush1.bf16.msra.mxu0 %v692
        %721 = vmatprep.subr.bf16.mxu0 0
        %722 = vmatpush1.bf16.msra.mxu0 %v691
        %723 = vmatprep.subr.bf16.mxu0 0
        %724 = vmatpush2.bf16.msra.mxu0 0
        %725 = vmatprep.subr.bf16.mxu0 0
        %726 = vmatpush2.bf16.msra.mxu0 0
        %727 = vmatprep.subr.bf16.mxu0 0
        %728 = vmatpush2.bf16.msra.mxu0 0
        %729 = vmatprep.subr.bf16.mxu0 0
        %730 = vmatpush2.bf16.msra.mxu0 0
        %731 = vmatprep.subr.bf16.mxu0 0
        %732 = vmatpush2.bf16.msra.mxu0 0
        %733 = vmatprep.subr.bf16.mxu0 0
        %734 = vmatpush2.bf16.msra.mxu0 0
        %735 = vmatprep.subr.bf16.mxu0 0
        %736 = vmatpush2.bf16.msra.mxu0 0
        %737 = vmatprep.subr.bf16.mxu0 0
        %738 = vmatpush2.bf16.msra.mxu0 0
        %739 = vmatprep.mubr.bf16.mxu0 0
        %740 = vmatmul.mubr.bf16.gmra.mxu0 %v635
        %v741 = vpop.f32.mrf.mxu0
        %v742 = vadd.f32 %v657, %v741
        %v743 = vpop.f32.mrf.mxu0
        %v744 = vpop.f32.mrf.mxu0
        %v745 = vadd.f32 %v657, %v744
        %v746 = vpop.f32.mrf.mxu0
        %747 = vdwg.mxu0
        %v748 = vmul.f32 %v742, 0.5
        %v749 = vmul.f32 %v745, 0.5
        %v750 = vmul.f32 %v742, 0.70710677
        %v751 = vmul.f32 %v745, 0.70710677
        %v752 = verf.f32.pop %v750
        %v753 = verf.f32.pop %v751
        %v754 = vadd.f32 %v752, 1.0
        %v755 = vadd.f32 %v753, 1.0
        %v756 = vmul.f32 %v748, %v754
        %v757 = vmul.f32 %v749, %v755
        %v758 = vpack.c.bf16 %v757, %v756
        %v759 = vld [vmem:[%s7] sm:$0xf]
        %v760 = vld [vmem:[%s7 + $0x4] sm:$0xf]
        %v761 = vld [vmem:[%s7 + $0x8] sm:$0xf]
        %v762 = vld [vmem:[%s7 + $0xc] sm:$0xf]
        %v763 = vld [vmem:[%s7 + $0x10] sm:$0xf]
        %v764 = vld [vmem:[%s7 + $0x14] sm:$0xf]
        %v765 = vld [vmem:[%s7 + $0x18] sm:$0xf]
        %v766 = vld [vmem:[%s7 + $0x1c] sm:$0xf]
        %v767 = vld [vmem:[%s7 + $0x20] sm:$0xf]
        %v768 = vld [vmem:[%s7 + $0x24] sm:$0xf]
        %v769 = vld [vmem:[%s7 + $0x28] sm:$0xf]
        %v770 = vld [vmem:[%s7 + $0x2c] sm:$0xf]
        %v771 = vld [vmem:[%s7 + $0x30] sm:$0xf]
        %v772 = vld [vmem:[%s7 + $0x34] sm:$0xf]
        %v773 = vld [vmem:[%s7 + $0x38] sm:$0xf]
        %v774 = vld [vmem:[%s7 + $0x3c] sm:$0xf]
        %v775 = vld [vmem:[%s8] sm:$0x1]
        %v777 = vlaneseq
        %v778 = vshrl.u32 %v777, 7
        %v779 = vsub.s32 0, %v778
        %v780 = vrot.slane %v775, %v779
        %v798 = vunpack.c.l.b16 %v759
        %v799 = vunpack.c.l.b16 %v760
        %v800 = vunpack.c.l.b16 %v761
        %v801 = vunpack.c.l.b16 %v762
        %v802 = vunpack.c.l.b16 %v763
        %v803 = vunpack.c.l.b16 %v764
        %v804 = vunpack.c.l.b16 %v765
        %v805 = vunpack.c.l.b16 %v766
        %v806 = vunpack.c.l.b16 %v767
        %v807 = vunpack.c.l.b16 %v768
        %v808 = vunpack.c.l.b16 %v769
        %v809 = vunpack.c.l.b16 %v770
        %v810 = vunpack.c.l.b16 %v771
        %v811 = vunpack.c.l.b16 %v772
        %v812 = vunpack.c.l.b16 %v773
        %v813 = vunpack.c.l.b16 %v774
        %v814 = vpack.c.b16 %v799, %v798
        %v815 = vpack.c.b16 %v801, %v800
        %v816 = vpack.c.b16 %v803, %v802
        %v817 = vpack.c.b16 %v805, %v804
        %v818 = vpack.c.b16 %v807, %v806
        %v819 = vpack.c.b16 %v809, %v808
        %v820 = vpack.c.b16 %v811, %v810
        %v821 = vpack.c.b16 %v813, %v812
        %830 = vmatprep.subr.bf16.mxu0 0
        %831 = vmatpush1.bf16.msra.mxu0 %v821
        %832 = vmatprep.subr.bf16.mxu0 0
        %833 = vmatpush1.bf16.msra.mxu0 %v820
        %834 = vmatprep.subr.bf16.mxu0 0
        %835 = vmatpush1.bf16.msra.mxu0 %v819
        %836 = vmatprep.subr.bf16.mxu0 0
        %837 = vmatpush1.bf16.msra.mxu0 %v818
        %838 = vmatprep.subr.bf16.mxu0 0
        %839 = vmatpush1.bf16.msra.mxu0 %v817
        %840 = vmatprep.subr.bf16.mxu0 0
        %841 = vmatpush1.bf16.msra.mxu0 %v816
        %842 = vmatprep.subr.bf16.mxu0 0
        %843 = vmatpush1.bf16.msra.mxu0 %v815
        %844 = vmatprep.subr.bf16.mxu0 0
        %845 = vmatpush1.bf16.msra.mxu0 %v814
        %846 = vmatprep.subr.bf16.mxu0 0
        %847 = vmatpush2.bf16.msra.mxu0 0
        %848 = vmatprep.subr.bf16.mxu0 0
        %849 = vmatpush2.bf16.msra.mxu0 0
        %850 = vmatprep.subr.bf16.mxu0 0
        %851 = vmatpush2.bf16.msra.mxu0 0
        %852 = vmatprep.subr.bf16.mxu0 0
        %853 = vmatpush2.bf16.msra.mxu0 0
        %854 = vmatprep.subr.bf16.mxu0 0
        %855 = vmatpush2.bf16.msra.mxu0 0
        %856 = vmatprep.subr.bf16.mxu0 0
        %857 = vmatpush2.bf16.msra.mxu0 0
        %858 = vmatprep.subr.bf16.mxu0 0
        %859 = vmatpush2.bf16.msra.mxu0 0
        %860 = vmatprep.subr.bf16.mxu0 0
        %861 = vmatpush2.bf16.msra.mxu0 0
        %862 = vmatprep.mubr.bf16.mxu0 0
        %863 = vmatmul.mubr.bf16.gmra.mxu0 %v758
        %v864 = vpop.f32.mrf.mxu0
        %v865 = vadd.f32 %v780, %v864
        %v866 = vpop.f32.mrf.mxu0
        %v867 = vpop.f32.mrf.mxu0
        %v868 = vadd.f32 %v780, %v867
        %v869 = vpop.f32.mrf.mxu0
        %870 = vdwg.mxu0
        %v873 = vrot.slane %v865, 5
        %v874 = vrot.slane %v868, 5
        %v875 = vsel %vm549, %v873, %v874
        %v879 = vadd.f32 %v449, %v873
        %v880 = vadd.f32 %v450, %v875
        %v881 = vadd.f32 %v451, %v874
        %882 = vst [vmem:[%s298 - $0x3] sm:$0xf8] %v879
        %883 = vst [vmem:[%s298 + $0x5] sm:$0xff] %v880
        %884 = vst [vmem:[%s298 + $0xd] sm:$0x7] %v881
        %s885 = sand.u32 %s213, 1
        %s886 = scalar_lea.sflag [#allocation5], %s885
        %s887 = sand.u32 %s213, 1
        %s888 = smul.addr %s887, 16
        %s889 = scalar_lea.vmem [#allocation4], %s888
        // Predicated region
        $region135: #{tpu_custom_call.1} parent=51 // pred_check
          %p890 = pneg %p223
        $region136: #{tpu_custom_call.1} parent=51 // pred_check_branch
          %892 = sbr.rel (%p890) target = $region138
        $region137: #{tpu_custom_call.1} parent=51 // pred_region
          %s893 = smul.u32 2, %s28
          %s895 = ssub.s32 256, 256
          %896 = vsyncadd %s886, %s895
          %s897 = smul.addr %s27, 6
          %s898 = sadd.s32 %s893, %s897
          %s899 = smul.addr %s898, 128
          %s900 = scalar_lea.hbm %s9, %s899
          %s901 = sshll.u32 %s889, 4
          %s902 = int_to_ptr.vmem [resolvable:$true] %s901
          %907 = dma.vmem_to_hbm [thread:$0]  %s902, 256, %s900, %s886, 128, 128, 8
        $region138: #{tpu_custom_call.1} parent=51 // pred_fallthru
          _
      $region52: #{tpu_custom_call.1} parent=5 // pred_fallthru
        _
      %p908 = scmp.le.s32.totalorder 2, %s18
      // Predicated region
      $region139: #{tpu_custom_call.1} parent=5 // pred_check
        %p909 = pneg %p908
      $region140: #{tpu_custom_call.1} parent=5 // pred_check_branch
        %911 = sbr.rel (%p909) target = $region142
      $region141: #{tpu_custom_call.1} parent=5 // pred_region
        %s912 = ssub.s32 %s18, 2
        // Predicated region
        $region143: #{tpu_custom_call.1} parent=141 // pred_check
          %p913 = pneg %p229
        $region144: #{tpu_custom_call.1} parent=141 // pred_check_branch
          %915 = sbr.rel (%p913) target = $region146
        $region145: #{tpu_custom_call.1} parent=141 // pred_region
          %s916 = sand.u32 %s214, 1
          %s917 = scalar_lea.sflag [#allocation5], %s916
          %s918 = sand.u32 %s214, 1
          %s919 = smul.addr %s918, 16
          %s920 = scalar_lea.vmem [#allocation4], %s919
          %921 = dma.done %s917, 256
        $region146: #{tpu_custom_call.1} parent=141 // pred_fallthru
          _
      $region142: #{tpu_custom_call.1} parent=5 // pred_fallthru
        _
    $region6: #{tpu_custom_call.1} parent=1 // loop_footer
      %s22 = sadd.s32 1, %s18
    $region7: #{tpu_custom_call.1} parent=1 // loop_footer_branch
      %17 = sbr.rel target = $region3
    $region8: #{tpu_custom_call.1} parent=1 // loop_exit
      _
    %922 = vsyncpa [#allocation5], 1
    %s923 = scalar_lea.sflag [#allocation5], 1
    %924 = vsyncpa %s923, 1
  %925 = vsyncmov [#allocation3]
  %s926 = vpop.sfrf %925
  %p927 = scmp.eq.s32.totalorder %s926, 0
  %p928 = pneg %p927
  %930 = shalt.err (%p928)
  %s931 = scalar_lea.sflag [#allocation3], 1
  %932 = vsyncmov %s931
  %s933 = vpop.sfrf %932
  %p934 = scmp.eq.s32.totalorder %s933, 0
  %p935 = pneg %p934
  %937 = shalt.err (%p935)

</llo_original>
